<compile_context>
chip_gen: v7x
topology: tpu7x:2x2x1
jax: 0.10.0
libtpu: 0.0.40
codegen_flags: <defaults>
</compile_context>

<pallas_src>
import jax
import jax.numpy as jnp
from jax.experimental import pallas as pl
from jax.experimental.pallas import tpu as pltpu

LANE = 128            # batch is mapped to the lane axis
MAX_BATCH_TILE = 512  # lane tile per grid step (multiple of 128)


def _dense_rows(rows, w_ref, b_ref, fan_in, fan_out):
    """Unrolled VPU dense layer.

    `rows` is a list of (1, bt) lane vectors (batch on lanes).  Computes
    out[j] = sum_i rows[i] * w[i, j] + b[j] with weights/biases read as SMEM
    scalars and broadcast across the lane vector; the bias starts the chain.
    """
    out_rows = []
    for j in range(fan_out):
        acc = rows[0] * w_ref[0, j] + b_ref[j]
        for i in range(1, fan_in):
            acc = acc + rows[i] * w_ref[i, j]
        out_rows.append(acc)
    return out_rows


def mlp_kernel(x_ref, w1_ref, b1_ref, w2_ref, b2_ref, w3_ref, b3_ref, o_ref):
    # x_ref: (2, bt) f32, batch on lanes.  All contractions are tiny, so they run
    # as unrolled VALU mul-adds instead of padding the MXU to <2% utilization.
    x_rows = [x_ref[i:i + 1, :] for i in range(2)]
    h1 = [jnp.tanh(r) for r in _dense_rows(x_rows, w1_ref, b1_ref, 2, 8)]
    h2 = [jnp.maximum(r, 0.0) for r in _dense_rows(h1, w2_ref, b2_ref, 8, 4)]
    z = _dense_rows(h2, w3_ref, b3_ref, 4, 1)[0]          # (1, bt)
    o_ref[...] = jax.nn.sigmoid(z)                        # lane-dense store


def mlp_forward(x, params):
    """x: (B, 2) f32 (PyTorch row-vector convention). Returns (B, 1)."""
    w1, b1, w2, b2, w3, b3 = params
    B = x.shape[0]

    # Lane-aligned batch tile (capped) and zero-padding so every block is full.
    bt = min(MAX_BATCH_TILE, pl.cdiv(B, LANE) * LANE)
    b_pad = pl.cdiv(B, bt) * bt
    x_t = jnp.pad(x.T.astype(jnp.float32), ((0, 0), (0, b_pad - B)))  # (2, B_pad)

    smem = pl.BlockSpec(memory_space=pltpu.MemorySpace.SMEM)  # whole-array resident

    out_t = pl.pallas_call(
        mlp_kernel,
        out_shape=jax.ShapeDtypeStruct((1, b_pad), jnp.float32),
        grid=(b_pad // bt,),
        in_specs=[pl.BlockSpec((2, bt), lambda i: (0, i)),  # x: batch on lanes
                  smem, smem, smem, smem, smem, smem],
        out_specs=pl.BlockSpec((1, bt), lambda i: (0, i)),
        compiler_params=pltpu.CompilerParams(
            dimension_semantics=("parallel",)),
    )(x_t, w1, b1, w2, b2, w3, b3)

    return out_t[0, :B].reshape(B, 1)


def init_params(key):
    # Deterministic init mimicking nn.Linear's U(-1/sqrt(fan_in), 1/sqrt(fan_in)).
    # Weights stored (in_features, out_features): x @ W + b == PyTorch x @ W.T + b.
    ks = jax.random.split(key, 6)

    def linear(kw, kb, fan_in, fan_out):
        bound = 1.0 / float(fan_in) ** 0.5
        w = jax.random.uniform(kw, (fan_in, fan_out), jnp.float32, -bound, bound)
        b = jax.random.uniform(kb, (fan_out,), jnp.float32, -bound, bound)
        return w, b

    w1, b1 = linear(ks[0], ks[1], 2, 8)
    w2, b2 = linear(ks[2], ks[3], 8, 4)
    w3, b3 = linear(ks[4], ks[5], 4, 1)
    return (w1, b1, w2, b2, w3, b3)


def reference_forward(x, params):
    w1, b1, w2, b2, w3, b3 = params
    h = jnp.tanh(x @ w1 + b1)
    h = jnp.maximum(h @ w2 + b2, 0.0)
    return jax.nn.sigmoid(h @ w3 + b3)


if __name__ == "__main__":
    key = jax.random.PRNGKey(0)
    kx, kp = jax.random.split(key)

    B = 8  # small batch, consistent with the 2-feature input of the module
    x = jax.random.normal(kx, (B, 2), dtype=jnp.float32)
    params = init_params(kp)

    out = jax.block_until_ready(mlp_forward(x, params))
    ref = reference_forward(x, params)

    assert out.shape == (B, 1)
    assert jnp.allclose(out, ref, atol=1e-5, rtol=1e-5)

    print("KERNEL_OK")
</pallas_src>

<mosaic_0001>
module attributes {stable_mosaic.version = 11 : i64} {
  func.func @mlp_kernel(%arg0: i32, %arg1: memref<2x128xf32, #tpu.memory_space<vmem>>, %arg2: memref<2x8xf32, #tpu.memory_space<smem>>, %arg3: memref<8xf32, #tpu.memory_space<smem>>, %arg4: memref<8x4xf32, #tpu.memory_space<smem>>, %arg5: memref<4xf32, #tpu.memory_space<smem>>, %arg6: memref<4x1xf32, #tpu.memory_space<smem>>, %arg7: memref<1xf32, #tpu.memory_space<smem>>, %arg8: memref<1x128xf32, #tpu.memory_space<vmem>>) attributes {dimension_semantics = [#tpu.dimension_semantics<parallel>], iteration_bounds = array<i64: 1>, scalar_prefetch = 0 : i64, scratch_operands = 0 : i64, tpu.core_type = #tpu.core_type<tc>, window_params = [{transform_indices = @transform_0, window_bounds = array<i64: 2, 128>}, {transform_indices = @transform_1, window_bounds = array<i64: 2, 8>}, {transform_indices = @transform_2, window_bounds = array<i64: 8>}, {transform_indices = @transform_3, window_bounds = array<i64: 8, 4>}, {transform_indices = @transform_4, window_bounds = array<i64: 4>}, {transform_indices = @transform_5, window_bounds = array<i64: 4, 1>}, {transform_indices = @transform_6, window_bounds = array<i64: 1>}, {transform_indices = @transform_7, window_bounds = array<i64: 1, 128>}]} {
    %c0 = arith.constant 0 : index
    %c0_0 = arith.constant 0 : index
    %0 = vector.load %arg1[%c0, %c0_0] : memref<2x128xf32, #tpu.memory_space<vmem>>, vector<1x128xf32>
    %c1 = arith.constant 1 : index
    %c0_1 = arith.constant 0 : index
    %1 = vector.load %arg1[%c1, %c0_1] : memref<2x128xf32, #tpu.memory_space<vmem>>, vector<1x128xf32>
    %c0_2 = arith.constant 0 : index
    %c0_3 = arith.constant 0 : index
    %2 = memref.load %arg2[%c0_2, %c0_3] : memref<2x8xf32, #tpu.memory_space<smem>>
    %3 = vector.broadcast %2 : f32 to vector<1x128xf32>
    %4 = arith.mulf %0, %3 : vector<1x128xf32>
    %c0_4 = arith.constant 0 : index
    %5 = memref.load %arg3[%c0_4] : memref<8xf32, #tpu.memory_space<smem>>
    %6 = vector.broadcast %5 : f32 to vector<1x128xf32>
    %7 = arith.addf %4, %6 : vector<1x128xf32>
    %c1_5 = arith.constant 1 : index
    %c0_6 = arith.constant 0 : index
    %8 = memref.load %arg2[%c1_5, %c0_6] : memref<2x8xf32, #tpu.memory_space<smem>>
    %9 = vector.broadcast %8 : f32 to vector<1x128xf32>
    %10 = arith.mulf %1, %9 : vector<1x128xf32>
    %11 = arith.addf %7, %10 : vector<1x128xf32>
    %c0_7 = arith.constant 0 : index
    %c1_8 = arith.constant 1 : index
    %12 = memref.load %arg2[%c0_7, %c1_8] : memref<2x8xf32, #tpu.memory_space<smem>>
    %13 = vector.broadcast %12 : f32 to vector<1x128xf32>
    %14 = arith.mulf %0, %13 : vector<1x128xf32>
    %c1_9 = arith.constant 1 : index
    %15 = memref.load %arg3[%c1_9] : memref<8xf32, #tpu.memory_space<smem>>
    %16 = vector.broadcast %15 : f32 to vector<1x128xf32>
    %17 = arith.addf %14, %16 : vector<1x128xf32>
    %c1_10 = arith.constant 1 : index
    %c1_11 = arith.constant 1 : index
    %18 = memref.load %arg2[%c1_10, %c1_11] : memref<2x8xf32, #tpu.memory_space<smem>>
    %19 = vector.broadcast %18 : f32 to vector<1x128xf32>
    %20 = arith.mulf %1, %19 : vector<1x128xf32>
    %21 = arith.addf %17, %20 : vector<1x128xf32>
    %c0_12 = arith.constant 0 : index
    %c2 = arith.constant 2 : index
    %22 = memref.load %arg2[%c0_12, %c2] : memref<2x8xf32, #tpu.memory_space<smem>>
    %23 = vector.broadcast %22 : f32 to vector<1x128xf32>
    %24 = arith.mulf %0, %23 : vector<1x128xf32>
    %c2_13 = arith.constant 2 : index
    %25 = memref.load %arg3[%c2_13] : memref<8xf32, #tpu.memory_space<smem>>
    %26 = vector.broadcast %25 : f32 to vector<1x128xf32>
    %27 = arith.addf %24, %26 : vector<1x128xf32>
    %c1_14 = arith.constant 1 : index
    %c2_15 = arith.constant 2 : index
    %28 = memref.load %arg2[%c1_14, %c2_15] : memref<2x8xf32, #tpu.memory_space<smem>>
    %29 = vector.broadcast %28 : f32 to vector<1x128xf32>
    %30 = arith.mulf %1, %29 : vector<1x128xf32>
    %31 = arith.addf %27, %30 : vector<1x128xf32>
    %c0_16 = arith.constant 0 : index
    %c3 = arith.constant 3 : index
    %32 = memref.load %arg2[%c0_16, %c3] : memref<2x8xf32, #tpu.memory_space<smem>>
    %33 = vector.broadcast %32 : f32 to vector<1x128xf32>
    %34 = arith.mulf %0, %33 : vector<1x128xf32>
    %c3_17 = arith.constant 3 : index
    %35 = memref.load %arg3[%c3_17] : memref<8xf32, #tpu.memory_space<smem>>
    %36 = vector.broadcast %35 : f32 to vector<1x128xf32>
    %37 = arith.addf %34, %36 : vector<1x128xf32>
    %c1_18 = arith.constant 1 : index
    %c3_19 = arith.constant 3 : index
    %38 = memref.load %arg2[%c1_18, %c3_19] : memref<2x8xf32, #tpu.memory_space<smem>>
    %39 = vector.broadcast %38 : f32 to vector<1x128xf32>
    %40 = arith.mulf %1, %39 : vector<1x128xf32>
    %41 = arith.addf %37, %40 : vector<1x128xf32>
    %c0_20 = arith.constant 0 : index
    %c4 = arith.constant 4 : index
    %42 = memref.load %arg2[%c0_20, %c4] : memref<2x8xf32, #tpu.memory_space<smem>>
    %43 = vector.broadcast %42 : f32 to vector<1x128xf32>
    %44 = arith.mulf %0, %43 : vector<1x128xf32>
    %c4_21 = arith.constant 4 : index
    %45 = memref.load %arg3[%c4_21] : memref<8xf32, #tpu.memory_space<smem>>
    %46 = vector.broadcast %45 : f32 to vector<1x128xf32>
    %47 = arith.addf %44, %46 : vector<1x128xf32>
    %c1_22 = arith.constant 1 : index
    %c4_23 = arith.constant 4 : index
    %48 = memref.load %arg2[%c1_22, %c4_23] : memref<2x8xf32, #tpu.memory_space<smem>>
    %49 = vector.broadcast %48 : f32 to vector<1x128xf32>
    %50 = arith.mulf %1, %49 : vector<1x128xf32>
    %51 = arith.addf %47, %50 : vector<1x128xf32>
    %c0_24 = arith.constant 0 : index
    %c5 = arith.constant 5 : index
    %52 = memref.load %arg2[%c0_24, %c5] : memref<2x8xf32, #tpu.memory_space<smem>>
    %53 = vector.broadcast %52 : f32 to vector<1x128xf32>
    %54 = arith.mulf %0, %53 : vector<1x128xf32>
    %c5_25 = arith.constant 5 : index
    %55 = memref.load %arg3[%c5_25] : memref<8xf32, #tpu.memory_space<smem>>
    %56 = vector.broadcast %55 : f32 to vector<1x128xf32>
    %57 = arith.addf %54, %56 : vector<1x128xf32>
    %c1_26 = arith.constant 1 : index
    %c5_27 = arith.constant 5 : index
    %58 = memref.load %arg2[%c1_26, %c5_27] : memref<2x8xf32, #tpu.memory_space<smem>>
    %59 = vector.broadcast %58 : f32 to vector<1x128xf32>
    %60 = arith.mulf %1, %59 : vector<1x128xf32>
    %61 = arith.addf %57, %60 : vector<1x128xf32>
    %c0_28 = arith.constant 0 : index
    %c6 = arith.constant 6 : index
    %62 = memref.load %arg2[%c0_28, %c6] : memref<2x8xf32, #tpu.memory_space<smem>>
    %63 = vector.broadcast %62 : f32 to vector<1x128xf32>
    %64 = arith.mulf %0, %63 : vector<1x128xf32>
    %c6_29 = arith.constant 6 : index
    %65 = memref.load %arg3[%c6_29] : memref<8xf32, #tpu.memory_space<smem>>
    %66 = vector.broadcast %65 : f32 to vector<1x128xf32>
    %67 = arith.addf %64, %66 : vector<1x128xf32>
    %c1_30 = arith.constant 1 : index
    %c6_31 = arith.constant 6 : index
    %68 = memref.load %arg2[%c1_30, %c6_31] : memref<2x8xf32, #tpu.memory_space<smem>>
    %69 = vector.broadcast %68 : f32 to vector<1x128xf32>
    %70 = arith.mulf %1, %69 : vector<1x128xf32>
    %71 = arith.addf %67, %70 : vector<1x128xf32>
    %c0_32 = arith.constant 0 : index
    %c7 = arith.constant 7 : index
    %72 = memref.load %arg2[%c0_32, %c7] : memref<2x8xf32, #tpu.memory_space<smem>>
    %73 = vector.broadcast %72 : f32 to vector<1x128xf32>
    %74 = arith.mulf %0, %73 : vector<1x128xf32>
    %c7_33 = arith.constant 7 : index
    %75 = memref.load %arg3[%c7_33] : memref<8xf32, #tpu.memory_space<smem>>
    %76 = vector.broadcast %75 : f32 to vector<1x128xf32>
    %77 = arith.addf %74, %76 : vector<1x128xf32>
    %c1_34 = arith.constant 1 : index
    %c7_35 = arith.constant 7 : index
    %78 = memref.load %arg2[%c1_34, %c7_35] : memref<2x8xf32, #tpu.memory_space<smem>>
    %79 = vector.broadcast %78 : f32 to vector<1x128xf32>
    %80 = arith.mulf %1, %79 : vector<1x128xf32>
    %81 = arith.addf %77, %80 : vector<1x128xf32>
    %82 = math.tanh %11 : vector<1x128xf32>
    %83 = math.tanh %21 : vector<1x128xf32>
    %84 = math.tanh %31 : vector<1x128xf32>
    %85 = math.tanh %41 : vector<1x128xf32>
    %86 = math.tanh %51 : vector<1x128xf32>
    %87 = math.tanh %61 : vector<1x128xf32>
    %88 = math.tanh %71 : vector<1x128xf32>
    %89 = math.tanh %81 : vector<1x128xf32>
    %c0_36 = arith.constant 0 : index
    %c0_37 = arith.constant 0 : index
    %90 = memref.load %arg4[%c0_36, %c0_37] : memref<8x4xf32, #tpu.memory_space<smem>>
    %91 = vector.broadcast %90 : f32 to vector<1x128xf32>
    %92 = arith.mulf %82, %91 : vector<1x128xf32>
    %c0_38 = arith.constant 0 : index
    %93 = memref.load %arg5[%c0_38] : memref<4xf32, #tpu.memory_space<smem>>
    %94 = vector.broadcast %93 : f32 to vector<1x128xf32>
    %95 = arith.addf %92, %94 : vector<1x128xf32>
    %c1_39 = arith.constant 1 : index
    %c0_40 = arith.constant 0 : index
    %96 = memref.load %arg4[%c1_39, %c0_40] : memref<8x4xf32, #tpu.memory_space<smem>>
    %97 = vector.broadcast %96 : f32 to vector<1x128xf32>
    %98 = arith.mulf %83, %97 : vector<1x128xf32>
    %99 = arith.addf %95, %98 : vector<1x128xf32>
    %c2_41 = arith.constant 2 : index
    %c0_42 = arith.constant 0 : index
    %100 = memref.load %arg4[%c2_41, %c0_42] : memref<8x4xf32, #tpu.memory_space<smem>>
    %101 = vector.broadcast %100 : f32 to vector<1x128xf32>
    %102 = arith.mulf %84, %101 : vector<1x128xf32>
    %103 = arith.addf %99, %102 : vector<1x128xf32>
    %c3_43 = arith.constant 3 : index
    %c0_44 = arith.constant 0 : index
    %104 = memref.load %arg4[%c3_43, %c0_44] : memref<8x4xf32, #tpu.memory_space<smem>>
    %105 = vector.broadcast %104 : f32 to vector<1x128xf32>
    %106 = arith.mulf %85, %105 : vector<1x128xf32>
    %107 = arith.addf %103, %106 : vector<1x128xf32>
    %c4_45 = arith.constant 4 : index
    %c0_46 = arith.constant 0 : index
    %108 = memref.load %arg4[%c4_45, %c0_46] : memref<8x4xf32, #tpu.memory_space<smem>>
    %109 = vector.broadcast %108 : f32 to vector<1x128xf32>
    %110 = arith.mulf %86, %109 : vector<1x128xf32>
    %111 = arith.addf %107, %110 : vector<1x128xf32>
    %c5_47 = arith.constant 5 : index
    %c0_48 = arith.constant 0 : index
    %112 = memref.load %arg4[%c5_47, %c0_48] : memref<8x4xf32, #tpu.memory_space<smem>>
    %113 = vector.broadcast %112 : f32 to vector<1x128xf32>
    %114 = arith.mulf %87, %113 : vector<1x128xf32>
    %115 = arith.addf %111, %114 : vector<1x128xf32>
    %c6_49 = arith.constant 6 : index
    %c0_50 = arith.constant 0 : index
    %116 = memref.load %arg4[%c6_49, %c0_50] : memref<8x4xf32, #tpu.memory_space<smem>>
    %117 = vector.broadcast %116 : f32 to vector<1x128xf32>
    %118 = arith.mulf %88, %117 : vector<1x128xf32>
    %119 = arith.addf %115, %118 : vector<1x128xf32>
    %c7_51 = arith.constant 7 : index
    %c0_52 = arith.constant 0 : index
    %120 = memref.load %arg4[%c7_51, %c0_52] : memref<8x4xf32, #tpu.memory_space<smem>>
    %121 = vector.broadcast %120 : f32 to vector<1x128xf32>
    %122 = arith.mulf %89, %121 : vector<1x128xf32>
    %123 = arith.addf %119, %122 : vector<1x128xf32>
    %c0_53 = arith.constant 0 : index
    %c1_54 = arith.constant 1 : index
    %124 = memref.load %arg4[%c0_53, %c1_54] : memref<8x4xf32, #tpu.memory_space<smem>>
    %125 = vector.broadcast %124 : f32 to vector<1x128xf32>
    %126 = arith.mulf %82, %125 : vector<1x128xf32>
    %c1_55 = arith.constant 1 : index
    %127 = memref.load %arg5[%c1_55] : memref<4xf32, #tpu.memory_space<smem>>
    %128 = vector.broadcast %127 : f32 to vector<1x128xf32>
    %129 = arith.addf %126, %128 : vector<1x128xf32>
    %c1_56 = arith.constant 1 : index
    %c1_57 = arith.constant 1 : index
    %130 = memref.load %arg4[%c1_56, %c1_57] : memref<8x4xf32, #tpu.memory_space<smem>>
    %131 = vector.broadcast %130 : f32 to vector<1x128xf32>
    %132 = arith.mulf %83, %131 : vector<1x128xf32>
    %133 = arith.addf %129, %132 : vector<1x128xf32>
    %c2_58 = arith.constant 2 : index
    %c1_59 = arith.constant 1 : index
    %134 = memref.load %arg4[%c2_58, %c1_59] : memref<8x4xf32, #tpu.memory_space<smem>>
    %135 = vector.broadcast %134 : f32 to vector<1x128xf32>
    %136 = arith.mulf %84, %135 : vector<1x128xf32>
    %137 = arith.addf %133, %136 : vector<1x128xf32>
    %c3_60 = arith.constant 3 : index
    %c1_61 = arith.constant 1 : index
    %138 = memref.load %arg4[%c3_60, %c1_61] : memref<8x4xf32, #tpu.memory_space<smem>>
    %139 = vector.broadcast %138 : f32 to vector<1x128xf32>
    %140 = arith.mulf %85, %139 : vector<1x128xf32>
    %141 = arith.addf %137, %140 : vector<1x128xf32>
    %c4_62 = arith.constant 4 : index
    %c1_63 = arith.constant 1 : index
    %142 = memref.load %arg4[%c4_62, %c1_63] : memref<8x4xf32, #tpu.memory_space<smem>>
    %143 = vector.broadcast %142 : f32 to vector<1x128xf32>
    %144 = arith.mulf %86, %143 : vector<1x128xf32>
    %145 = arith.addf %141, %144 : vector<1x128xf32>
    %c5_64 = arith.constant 5 : index
    %c1_65 = arith.constant 1 : index
    %146 = memref.load %arg4[%c5_64, %c1_65] : memref<8x4xf32, #tpu.memory_space<smem>>
    %147 = vector.broadcast %146 : f32 to vector<1x128xf32>
    %148 = arith.mulf %87, %147 : vector<1x128xf32>
    %149 = arith.addf %145, %148 : vector<1x128xf32>
    %c6_66 = arith.constant 6 : index
    %c1_67 = arith.constant 1 : index
    %150 = memref.load %arg4[%c6_66, %c1_67] : memref<8x4xf32, #tpu.memory_space<smem>>
    %151 = vector.broadcast %150 : f32 to vector<1x128xf32>
    %152 = arith.mulf %88, %151 : vector<1x128xf32>
    %153 = arith.addf %149, %152 : vector<1x128xf32>
    %c7_68 = arith.constant 7 : index
    %c1_69 = arith.constant 1 : index
    %154 = memref.load %arg4[%c7_68, %c1_69] : memref<8x4xf32, #tpu.memory_space<smem>>
    %155 = vector.broadcast %154 : f32 to vector<1x128xf32>
    %156 = arith.mulf %89, %155 : vector<1x128xf32>
    %157 = arith.addf %153, %156 : vector<1x128xf32>
    %c0_70 = arith.constant 0 : index
    %c2_71 = arith.constant 2 : index
    %158 = memref.load %arg4[%c0_70, %c2_71] : memref<8x4xf32, #tpu.memory_space<smem>>
    %159 = vector.broadcast %158 : f32 to vector<1x128xf32>
    %160 = arith.mulf %82, %159 : vector<1x128xf32>
    %c2_72 = arith.constant 2 : index
    %161 = memref.load %arg5[%c2_72] : memref<4xf32, #tpu.memory_space<smem>>
    %162 = vector.broadcast %161 : f32 to vector<1x128xf32>
    %163 = arith.addf %160, %162 : vector<1x128xf32>
    %c1_73 = arith.constant 1 : index
    %c2_74 = arith.constant 2 : index
    %164 = memref.load %arg4[%c1_73, %c2_74] : memref<8x4xf32, #tpu.memory_space<smem>>
    %165 = vector.broadcast %164 : f32 to vector<1x128xf32>
    %166 = arith.mulf %83, %165 : vector<1x128xf32>
    %167 = arith.addf %163, %166 : vector<1x128xf32>
    %c2_75 = arith.constant 2 : index
    %c2_76 = arith.constant 2 : index
    %168 = memref.load %arg4[%c2_75, %c2_76] : memref<8x4xf32, #tpu.memory_space<smem>>
    %169 = vector.broadcast %168 : f32 to vector<1x128xf32>
    %170 = arith.mulf %84, %169 : vector<1x128xf32>
    %171 = arith.addf %167, %170 : vector<1x128xf32>
    %c3_77 = arith.constant 3 : index
    %c2_78 = arith.constant 2 : index
    %172 = memref.load %arg4[%c3_77, %c2_78] : memref<8x4xf32, #tpu.memory_space<smem>>
    %173 = vector.broadcast %172 : f32 to vector<1x128xf32>
    %174 = arith.mulf %85, %173 : vector<1x128xf32>
    %175 = arith.addf %171, %174 : vector<1x128xf32>
    %c4_79 = arith.constant 4 : index
    %c2_80 = arith.constant 2 : index
    %176 = memref.load %arg4[%c4_79, %c2_80] : memref<8x4xf32, #tpu.memory_space<smem>>
    %177 = vector.broadcast %176 : f32 to vector<1x128xf32>
    %178 = arith.mulf %86, %177 : vector<1x128xf32>
    %179 = arith.addf %175, %178 : vector<1x128xf32>
    %c5_81 = arith.constant 5 : index
    %c2_82 = arith.constant 2 : index
    %180 = memref.load %arg4[%c5_81, %c2_82] : memref<8x4xf32, #tpu.memory_space<smem>>
    %181 = vector.broadcast %180 : f32 to vector<1x128xf32>
    %182 = arith.mulf %87, %181 : vector<1x128xf32>
    %183 = arith.addf %179, %182 : vector<1x128xf32>
    %c6_83 = arith.constant 6 : index
    %c2_84 = arith.constant 2 : index
    %184 = memref.load %arg4[%c6_83, %c2_84] : memref<8x4xf32, #tpu.memory_space<smem>>
    %185 = vector.broadcast %184 : f32 to vector<1x128xf32>
    %186 = arith.mulf %88, %185 : vector<1x128xf32>
    %187 = arith.addf %183, %186 : vector<1x128xf32>
    %c7_85 = arith.constant 7 : index
    %c2_86 = arith.constant 2 : index
    %188 = memref.load %arg4[%c7_85, %c2_86] : memref<8x4xf32, #tpu.memory_space<smem>>
    %189 = vector.broadcast %188 : f32 to vector<1x128xf32>
    %190 = arith.mulf %89, %189 : vector<1x128xf32>
    %191 = arith.addf %187, %190 : vector<1x128xf32>
    %c0_87 = arith.constant 0 : index
    %c3_88 = arith.constant 3 : index
    %192 = memref.load %arg4[%c0_87, %c3_88] : memref<8x4xf32, #tpu.memory_space<smem>>
    %193 = vector.broadcast %192 : f32 to vector<1x128xf32>
    %194 = arith.mulf %82, %193 : vector<1x128xf32>
    %c3_89 = arith.constant 3 : index
    %195 = memref.load %arg5[%c3_89] : memref<4xf32, #tpu.memory_space<smem>>
    %196 = vector.broadcast %195 : f32 to vector<1x128xf32>
    %197 = arith.addf %194, %196 : vector<1x128xf32>
    %c1_90 = arith.constant 1 : index
    %c3_91 = arith.constant 3 : index
    %198 = memref.load %arg4[%c1_90, %c3_91] : memref<8x4xf32, #tpu.memory_space<smem>>
    %199 = vector.broadcast %198 : f32 to vector<1x128xf32>
    %200 = arith.mulf %83, %199 : vector<1x128xf32>
    %201 = arith.addf %197, %200 : vector<1x128xf32>
    %c2_92 = arith.constant 2 : index
    %c3_93 = arith.constant 3 : index
    %202 = memref.load %arg4[%c2_92, %c3_93] : memref<8x4xf32, #tpu.memory_space<smem>>
    %203 = vector.broadcast %202 : f32 to vector<1x128xf32>
    %204 = arith.mulf %84, %203 : vector<1x128xf32>
    %205 = arith.addf %201, %204 : vector<1x128xf32>
    %c3_94 = arith.constant 3 : index
    %c3_95 = arith.constant 3 : index
    %206 = memref.load %arg4[%c3_94, %c3_95] : memref<8x4xf32, #tpu.memory_space<smem>>
    %207 = vector.broadcast %206 : f32 to vector<1x128xf32>
    %208 = arith.mulf %85, %207 : vector<1x128xf32>
    %209 = arith.addf %205, %208 : vector<1x128xf32>
    %c4_96 = arith.constant 4 : index
    %c3_97 = arith.constant 3 : index
    %210 = memref.load %arg4[%c4_96, %c3_97] : memref<8x4xf32, #tpu.memory_space<smem>>
    %211 = vector.broadcast %210 : f32 to vector<1x128xf32>
    %212 = arith.mulf %86, %211 : vector<1x128xf32>
    %213 = arith.addf %209, %212 : vector<1x128xf32>
    %c5_98 = arith.constant 5 : index
    %c3_99 = arith.constant 3 : index
    %214 = memref.load %arg4[%c5_98, %c3_99] : memref<8x4xf32, #tpu.memory_space<smem>>
    %215 = vector.broadcast %214 : f32 to vector<1x128xf32>
    %216 = arith.mulf %87, %215 : vector<1x128xf32>
    %217 = arith.addf %213, %216 : vector<1x128xf32>
    %c6_100 = arith.constant 6 : index
    %c3_101 = arith.constant 3 : index
    %218 = memref.load %arg4[%c6_100, %c3_101] : memref<8x4xf32, #tpu.memory_space<smem>>
    %219 = vector.broadcast %218 : f32 to vector<1x128xf32>
    %220 = arith.mulf %88, %219 : vector<1x128xf32>
    %221 = arith.addf %217, %220 : vector<1x128xf32>
    %c7_102 = arith.constant 7 : index
    %c3_103 = arith.constant 3 : index
    %222 = memref.load %arg4[%c7_102, %c3_103] : memref<8x4xf32, #tpu.memory_space<smem>>
    %223 = vector.broadcast %222 : f32 to vector<1x128xf32>
    %224 = arith.mulf %89, %223 : vector<1x128xf32>
    %225 = arith.addf %221, %224 : vector<1x128xf32>
    %cst = arith.constant 0.000000e+00 : f32
    %226 = vector.broadcast %cst : f32 to vector<1x128xf32>
    %227 = arith.maximumf %123, %226 : vector<1x128xf32>
    %cst_104 = arith.constant 0.000000e+00 : f32
    %228 = vector.broadcast %cst_104 : f32 to vector<1x128xf32>
    %229 = arith.maximumf %157, %228 : vector<1x128xf32>
    %cst_105 = arith.constant 0.000000e+00 : f32
    %230 = vector.broadcast %cst_105 : f32 to vector<1x128xf32>
    %231 = arith.maximumf %191, %230 : vector<1x128xf32>
    %cst_106 = arith.constant 0.000000e+00 : f32
    %232 = vector.broadcast %cst_106 : f32 to vector<1x128xf32>
    %233 = arith.maximumf %225, %232 : vector<1x128xf32>
    %c0_107 = arith.constant 0 : index
    %c0_108 = arith.constant 0 : index
    %234 = memref.load %arg6[%c0_107, %c0_108] : memref<4x1xf32, #tpu.memory_space<smem>>
    %235 = vector.broadcast %234 : f32 to vector<1x128xf32>
    %236 = arith.mulf %227, %235 : vector<1x128xf32>
    %c0_109 = arith.constant 0 : index
    %237 = memref.load %arg7[%c0_109] : memref<1xf32, #tpu.memory_space<smem>>
    %238 = vector.broadcast %237 : f32 to vector<1x128xf32>
    %239 = arith.addf %236, %238 : vector<1x128xf32>
    %c1_110 = arith.constant 1 : index
    %c0_111 = arith.constant 0 : index
    %240 = memref.load %arg6[%c1_110, %c0_111] : memref<4x1xf32, #tpu.memory_space<smem>>
    %241 = vector.broadcast %240 : f32 to vector<1x128xf32>
    %242 = arith.mulf %229, %241 : vector<1x128xf32>
    %243 = arith.addf %239, %242 : vector<1x128xf32>
    %c2_112 = arith.constant 2 : index
    %c0_113 = arith.constant 0 : index
    %244 = memref.load %arg6[%c2_112, %c0_113] : memref<4x1xf32, #tpu.memory_space<smem>>
    %245 = vector.broadcast %244 : f32 to vector<1x128xf32>
    %246 = arith.mulf %231, %245 : vector<1x128xf32>
    %247 = arith.addf %243, %246 : vector<1x128xf32>
    %c3_114 = arith.constant 3 : index
    %c0_115 = arith.constant 0 : index
    %248 = memref.load %arg6[%c3_114, %c0_115] : memref<4x1xf32, #tpu.memory_space<smem>>
    %249 = vector.broadcast %248 : f32 to vector<1x128xf32>
    %250 = arith.mulf %233, %249 : vector<1x128xf32>
    %251 = arith.addf %247, %250 : vector<1x128xf32>
    %252 = arith.negf %251 : vector<1x128xf32>
    %253 = math.exp %252 : vector<1x128xf32>
    %cst_116 = arith.constant 1.000000e+00 : f32
    %254 = vector.broadcast %cst_116 : f32 to vector<1x128xf32>
    %255 = arith.addf %254, %253 : vector<1x128xf32>
    %256 = arith.divf %254, %255 : vector<1x128xf32>
    %c0_117 = arith.constant 0 : index
    %c0_118 = arith.constant 0 : index
    %257 = vector.load %arg8[%c0_117, %c0_118] : memref<1x128xf32, #tpu.memory_space<vmem>>, vector<1x128xf32>
    tpu.vector_store %arg8[%c0_117, %c0_118], %256 {strides = array<i32>} : memref<1x128xf32, #tpu.memory_space<vmem>>, vector<1x128xf32>,
    return
  }
  func.func @transform_0(%arg0: i32) -> (i32, i32) {
    %c0_i32 = arith.constant 0 : i32
    %c0_i32_0 = arith.constant 0 : i32
    return %c0_i32, %arg0 : i32, i32
  }
  func.func @transform_1(%arg0: i32) -> (i32, i32) {
    %c0_i32 = arith.constant 0 : i32
    %c0_i32_0 = arith.constant 0 : i32
    %c0_i32_1 = arith.constant 0 : i32
    return %c0_i32, %c0_i32_0 : i32, i32
  }
  func.func @transform_2(%arg0: i32) -> i32 {
    %c0_i32 = arith.constant 0 : i32
    %c0_i32_0 = arith.constant 0 : i32
    return %c0_i32 : i32
  }
  func.func @transform_3(%arg0: i32) -> (i32, i32) {
    %c0_i32 = arith.constant 0 : i32
    %c0_i32_0 = arith.constant 0 : i32
    %c0_i32_1 = arith.constant 0 : i32
    return %c0_i32, %c0_i32_0 : i32, i32
  }
  func.func @transform_4(%arg0: i32) -> i32 {
    %c0_i32 = arith.constant 0 : i32
    %c0_i32_0 = arith.constant 0 : i32
    return %c0_i32 : i32
  }
  func.func @transform_5(%arg0: i32) -> (i32, i32) {
    %c0_i32 = arith.constant 0 : i32
    %c0_i32_0 = arith.constant 0 : i32
    %c0_i32_1 = arith.constant 0 : i32
    return %c0_i32, %c0_i32_0 : i32, i32
  }
  func.func @transform_6(%arg0: i32) -> i32 {
    %c0_i32 = arith.constant 0 : i32
    %c0_i32_0 = arith.constant 0 : i32
    return %c0_i32 : i32
  }
  func.func @transform_7(%arg0: i32) -> (i32, i32) {
    %c0_i32 = arith.constant 0 : i32
    %c0_i32_0 = arith.constant 0 : i32
    return %c0_i32, %arg0 : i32, i32
  }
}

</mosaic_0001>

<llo_original>
// kernel: tpu_custom_call.1
$region0: #{tpu_custom_call.1}
  #allocation0 [shape = 'u32[]', space=smem, size = 0x4, offset = 0x4, fixed_abs, tag = 'smem constant byte address 0x4 - core index']
  #allocation1 [shape = 'u32[144,128]{1,0:T(1,128)}', space=vmem, size = 0x12000, scoped, tag = 'internal scratch']
  #allocation2 [shape = 'f32[1]{0:T(128)S(6)}', space=smem, size = 0x200, scoped, tag = 'scoped memory for tpu_custom_call.1']
  %s0 = inlined_call_operand.vmem [shape: f32[2,128], index: 0, kind: input, shape index: {}]
  %s1 = inlined_call_operand.vmem [shape: f32[2,8], index: 1, kind: input, shape index: {}]
  %s2 = inlined_call_operand.vmem [shape: f32[8], index: 2, kind: input, shape index: {}]
  %s3 = inlined_call_operand.vmem [shape: f32[8,4], index: 3, kind: input, shape index: {}]
  %s4 = inlined_call_operand.vmem [shape: f32[4], index: 4, kind: input, shape index: {}]
  %s5 = inlined_call_operand.vmem [shape: f32[4,1], index: 5, kind: input, shape index: {}]
  %s6 = inlined_call_operand.<no memory space> [shape: f32[1], index: 6, kind: input, shape index: {}]
  %s7 = inlined_call_operand.hbm [shape: f32[1,128], index: 7, kind: output, shape index: {}]
  %s8 = sld [smem:[#allocation0]]
  $region58: #{tpu_custom_call.1} parent=0
    _
  %s10 = ssub.s32 1, %s8
  %s11 = scalar_select 0, %s10, %s8
  %12 = sst [smem:[#allocation2]] %s6
  $region1: #{tpu_custom_call.1} parent=0
    #allocation3 [shape = 'u8[1024]{0}', space=smem, size = 0x400, scoped, tag = 'input window, operand 1, single buffered']
    #allocation4 [shape = 's32[1]{0}', space=sflag, size = 0x4, scoped, tag = 'scoped memory for tpu_custom_call.1']
    #allocation5 [shape = 's32[1]{0}', space=sflag, size = 0x4, scoped, tag = 'scoped memory for tpu_custom_call.1']
    #allocation6 [shape = 'u8[512]{0}', space=smem, size = 0x200, scoped, tag = 'input window, operand 2, single buffered']
    #allocation7 [shape = 's32[1]{0}', space=sflag, size = 0x4, scoped, tag = 'scoped memory for tpu_custom_call.1']
    #allocation8 [shape = 'u8[4096]{0}', space=smem, size = 0x1000, scoped, tag = 'input window, operand 3, single buffered']
    #allocation9 [shape = 'u8[512]{0}', space=smem, size = 0x200, scoped, tag = 'input window, operand 4, single buffered']
    #allocation10 [shape = 's32[1]{0}', space=sflag, size = 0x4, scoped, tag = 'scoped memory for tpu_custom_call.1']
    #allocation11 [shape = 'u8[2048]{0}', space=smem, size = 0x800, scoped, tag = 'input window, operand 5, single buffered']
    #allocation12 [shape = 'u8[512]{0}', space=vmem, size = 0x400, scoped, tag = 'output window, operand 0, single buffered']
    %13 = vsyncpa [#allocation5], 0
    %14 = vsyncpa [#allocation7], 0
    %15 = vsyncpa [#allocation10], 0
    %16 = vsyncpa [#allocation4], 0
    // Predicated region
    $region2: #{tpu_custom_call.1} parent=1 // pred_check
      _
    $region3: #{tpu_custom_call.1} parent=1 // pred_check_branch
      %18 = sbr.rel (0) target = $region5
    $region4: #{tpu_custom_call.1} parent=1 // pred_region
      _
    $region5: #{tpu_custom_call.1} parent=1 // pred_fallthru
      _
    // Predicated region
    $region6: #{tpu_custom_call.1} parent=1 // pred_check
      _
    $region7: #{tpu_custom_call.1} parent=1 // pred_check_branch
      %20 = sbr.rel (0) target = $region9
    $region8: #{tpu_custom_call.1} parent=1 // pred_region
      %s22 = ssub.s32 32, 32
      %23 = vsyncadd [#allocation5], %s22
      %s25 = sshll.u32 %s1, 4
      %s26 = int_to_ptr.vmem [resolvable:$true] %s25
      %28 = dma.vmem_to_smem %s26, 32, [#allocation3], [#allocation5]
    $region9: #{tpu_custom_call.1} parent=1 // pred_fallthru
      _
    // Predicated region
    $region10: #{tpu_custom_call.1} parent=1 // pred_check
      _
    $region11: #{tpu_custom_call.1} parent=1 // pred_check_branch
      %30 = sbr.rel (0) target = $region13
    $region12: #{tpu_custom_call.1} parent=1 // pred_region
      %s32 = ssub.s32 16, 16
      %33 = vsyncadd [#allocation7], %s32
      %s35 = sshll.u32 %s2, 4
      %s36 = int_to_ptr.vmem [resolvable:$true] %s35
      %38 = dma.vmem_to_smem %s36, 16, [#allocation6], [#allocation7]
    $region13: #{tpu_custom_call.1} parent=1 // pred_fallthru
      _
    // Predicated region
    $region14: #{tpu_custom_call.1} parent=1 // pred_check
      _
    $region15: #{tpu_custom_call.1} parent=1 // pred_check_branch
      %40 = sbr.rel (0) target = $region17
    $region16: #{tpu_custom_call.1} parent=1 // pred_region
      %s42 = ssub.s32 128, 128
      %43 = vsyncadd [#allocation7], %s42
      %s45 = sshll.u32 %s3, 4
      %s46 = int_to_ptr.vmem [resolvable:$true] %s45
      %48 = dma.vmem_to_smem %s46, 128, [#allocation8], [#allocation7]
    $region17: #{tpu_custom_call.1} parent=1 // pred_fallthru
      _
    // Predicated region
    $region18: #{tpu_custom_call.1} parent=1 // pred_check
      _
    $region19: #{tpu_custom_call.1} parent=1 // pred_check_branch
      %50 = sbr.rel (0) target = $region21
    $region20: #{tpu_custom_call.1} parent=1 // pred_region
      %s52 = ssub.s32 16, 16
      %53 = vsyncadd [#allocation10], %s52
      %s55 = sshll.u32 %s4, 4
      %s56 = int_to_ptr.vmem [resolvable:$true] %s55
      %58 = dma.vmem_to_smem %s56, 16, [#allocation9], [#allocation10]
    $region21: #{tpu_custom_call.1} parent=1 // pred_fallthru
      _
    // Predicated region
    $region22: #{tpu_custom_call.1} parent=1 // pred_check
      _
    $region23: #{tpu_custom_call.1} parent=1 // pred_check_branch
      %60 = sbr.rel (0) target = $region25
    $region24: #{tpu_custom_call.1} parent=1 // pred_region
      %s62 = ssub.s32 64, 64
      %63 = vsyncadd [#allocation10], %s62
      %s65 = sshll.u32 %s5, 4
      %s66 = int_to_ptr.vmem [resolvable:$true] %s65
      %68 = dma.vmem_to_smem %s66, 64, [#allocation11], [#allocation10]
    $region25: #{tpu_custom_call.1} parent=1 // pred_fallthru
      _
    // Predicated region
    $region26: #{tpu_custom_call.1} parent=1 // pred_check
      _
    $region27: #{tpu_custom_call.1} parent=1 // pred_check_branch
      %70 = sbr.rel (0) target = $region29
    $region28: #{tpu_custom_call.1} parent=1 // pred_region
      _
    $region29: #{tpu_custom_call.1} parent=1 // pred_fallthru
      _
    // Predicated region
    $region30: #{tpu_custom_call.1} parent=1 // pred_check
      _
    $region31: #{tpu_custom_call.1} parent=1 // pred_check_branch
      %72 = sbr.rel (0) target = $region33
    $region32: #{tpu_custom_call.1} parent=1 // pred_region
      %73 = dma.done [#allocation5], 32
    $region33: #{tpu_custom_call.1} parent=1 // pred_fallthru
      _
    // Predicated region
    $region34: #{tpu_custom_call.1} parent=1 // pred_check
      _
    $region35: #{tpu_custom_call.1} parent=1 // pred_check_branch
      %75 = sbr.rel (0) target = $region37
    $region36: #{tpu_custom_call.1} parent=1 // pred_region
      %76 = dma.done [#allocation7], 16
    $region37: #{tpu_custom_call.1} parent=1 // pred_fallthru
      _
    // Predicated region
    $region38: #{tpu_custom_call.1} parent=1 // pred_check
      _
    $region39: #{tpu_custom_call.1} parent=1 // pred_check_branch
      %78 = sbr.rel (0) target = $region41
    $region40: #{tpu_custom_call.1} parent=1 // pred_region
      %79 = dma.done [#allocation7], 128
    $region41: #{tpu_custom_call.1} parent=1 // pred_fallthru
      _
    // Predicated region
    $region42: #{tpu_custom_call.1} parent=1 // pred_check
      _
    $region43: #{tpu_custom_call.1} parent=1 // pred_check_branch
      %81 = sbr.rel (0) target = $region45
    $region44: #{tpu_custom_call.1} parent=1 // pred_region
      %82 = dma.done [#allocation10], 16
    $region45: #{tpu_custom_call.1} parent=1 // pred_fallthru
      _
    // Predicated region
    $region46: #{tpu_custom_call.1} parent=1 // pred_check
      _
    $region47: #{tpu_custom_call.1} parent=1 // pred_check_branch
      %84 = sbr.rel (0) target = $region49
    $region48: #{tpu_custom_call.1} parent=1 // pred_region
      %85 = dma.done [#allocation10], 64
    $region49: #{tpu_custom_call.1} parent=1 // pred_fallthru
      _
    %86 = sfence
    %v87 = vld [vmem:[%s0] sm:$0x1]
    %v88 = vld [vmem:[%s0 + $0x1] sm:$0x1]
    %s89 = sld [smem:[#allocation3]]
    %v90 = vstv %s89
    %v91 = vmul.f32 %v87, %v90
    %s92 = sld [smem:[#allocation6]]
    %v93 = vstv %s92
    %v94 = vadd.f32 %v91, %v93
    %s95 = sld [smem:[#allocation3 + $0x80]]
    %v96 = vstv %s95
    %v97 = vmul.f32 %v88, %v96
    %v98 = vadd.f32 %v94, %v97
    %s99 = sld [smem:[#allocation3 + $0x1]]
    %v100 = vstv %s99
    %v101 = vmul.f32 %v87, %v100
    %s102 = sld [smem:[#allocation6 + $0x1]]
    %v103 = vstv %s102
    %v104 = vadd.f32 %v101, %v103
    %s105 = sld [smem:[#allocation3 + $0x81]]
    %v106 = vstv %s105
    %v107 = vmul.f32 %v88, %v106
    %v108 = vadd.f32 %v104, %v107
    %s109 = sld [smem:[#allocation3 + $0x2]]
    %v110 = vstv %s109
    %v111 = vmul.f32 %v87, %v110
    %s112 = sld [smem:[#allocation6 + $0x2]]
    %v113 = vstv %s112
    %v114 = vadd.f32 %v111, %v113
    %s115 = sld [smem:[#allocation3 + $0x82]]
    %v116 = vstv %s115
    %v117 = vmul.f32 %v88, %v116
    %v118 = vadd.f32 %v114, %v117
    %s119 = sld [smem:[#allocation3 + $0x3]]
    %v120 = vstv %s119
    %v121 = vmul.f32 %v87, %v120
    %s122 = sld [smem:[#allocation6 + $0x3]]
    %v123 = vstv %s122
    %v124 = vadd.f32 %v121, %v123
    %s125 = sld [smem:[#allocation3 + $0x83]]
    %v126 = vstv %s125
    %v127 = vmul.f32 %v88, %v126
    %v128 = vadd.f32 %v124, %v127
    %s129 = sld [smem:[#allocation3 + $0x4]]
    %v130 = vstv %s129
    %v131 = vmul.f32 %v87, %v130
    %s132 = sld [smem:[#allocation6 + $0x4]]
    %v133 = vstv %s132
    %v134 = vadd.f32 %v131, %v133
    %s135 = sld [smem:[#allocation3 + $0x84]]
    %v136 = vstv %s135
    %v137 = vmul.f32 %v88, %v136
    %v138 = vadd.f32 %v134, %v137
    %s139 = sld [smem:[#allocation3 + $0x5]]
    %v140 = vstv %s139
    %v141 = vmul.f32 %v87, %v140
    %s142 = sld [smem:[#allocation6 + $0x5]]
    %v143 = vstv %s142
    %v144 = vadd.f32 %v141, %v143
    %s145 = sld [smem:[#allocation3 + $0x85]]
    %v146 = vstv %s145
    %v147 = vmul.f32 %v88, %v146
    %v148 = vadd.f32 %v144, %v147
    %s149 = sld [smem:[#allocation3 + $0x6]]
    %v150 = vstv %s149
    %v151 = vmul.f32 %v87, %v150
    %s152 = sld [smem:[#allocation6 + $0x6]]
    %v153 = vstv %s152
    %v154 = vadd.f32 %v151, %v153
    %s155 = sld [smem:[#allocation3 + $0x86]]
    %v156 = vstv %s155
    %v157 = vmul.f32 %v88, %v156
    %v158 = vadd.f32 %v154, %v157
    %s159 = sld [smem:[#allocation3 + $0x7]]
    %v160 = vstv %s159
    %v161 = vmul.f32 %v87, %v160
    %s162 = sld [smem:[#allocation6 + $0x7]]
    %v163 = vstv %s162
    %v164 = vadd.f32 %v161, %v163
    %s165 = sld [smem:[#allocation3 + $0x87]]
    %v166 = vstv %s165
    %v167 = vmul.f32 %v88, %v166
    %v168 = vadd.f32 %v164, %v167
    %v169 = vtanh.pop %v98
    %v170 = vtanh.pop %v108
    %v171 = vtanh.pop %v118
    %v172 = vtanh.pop %v128
    %v173 = vtanh.pop %v138
    %v174 = vtanh.pop %v148
    %v175 = vtanh.pop %v158
    %v176 = vtanh.pop %v168
    %s177 = sld [smem:[#allocation8]]
    %v178 = vstv %s177
    %v179 = vmul.f32 %v169, %v178
    %s180 = sld [smem:[#allocation9]]
    %v181 = vstv %s180
    %v182 = vadd.f32 %v179, %v181
    %s183 = sld [smem:[#allocation8 + $0x80]]
    %v184 = vstv %s183
    %v185 = vmul.f32 %v170, %v184
    %v186 = vadd.f32 %v182, %v185
    %s187 = sld [smem:[#allocation8 + $0x100]]
    %v188 = vstv %s187
    %v189 = vmul.f32 %v171, %v188
    %v190 = vadd.f32 %v186, %v189
    %s191 = sld [smem:[#allocation8 + $0x180]]
    %v192 = vstv %s191
    %v193 = vmul.f32 %v172, %v192
    %v194 = vadd.f32 %v190, %v193
    %s195 = sld [smem:[#allocation8 + $0x200]]
    %v196 = vstv %s195
    %v197 = vmul.f32 %v173, %v196
    %v198 = vadd.f32 %v194, %v197
    %s199 = sld [smem:[#allocation8 + $0x280]]
    %v200 = vstv %s199
    %v201 = vmul.f32 %v174, %v200
    %v202 = vadd.f32 %v198, %v201
    %s203 = sld [smem:[#allocation8 + $0x300]]
    %v204 = vstv %s203
    %v205 = vmul.f32 %v175, %v204
    %v206 = vadd.f32 %v202, %v205
    %s207 = sld [smem:[#allocation8 + $0x380]]
    %v208 = vstv %s207
    %v209 = vmul.f32 %v176, %v208
    %v210 = vadd.f32 %v206, %v209
    %s211 = sld [smem:[#allocation8 + $0x1]]
    %v212 = vstv %s211
    %v213 = vmul.f32 %v169, %v212
    %s214 = sld [smem:[#allocation9 + $0x1]]
    %v215 = vstv %s214
    %v216 = vadd.f32 %v213, %v215
    %s217 = sld [smem:[#allocation8 + $0x81]]
    %v218 = vstv %s217
    %v219 = vmul.f32 %v170, %v218
    %v220 = vadd.f32 %v216, %v219
    %s221 = sld [smem:[#allocation8 + $0x101]]
    %v222 = vstv %s221
    %v223 = vmul.f32 %v171, %v222
    %v224 = vadd.f32 %v220, %v223
    %s225 = sld [smem:[#allocation8 + $0x181]]
    %v226 = vstv %s225
    %v227 = vmul.f32 %v172, %v226
    %v228 = vadd.f32 %v224, %v227
    %s229 = sld [smem:[#allocation8 + $0x201]]
    %v230 = vstv %s229
    %v231 = vmul.f32 %v173, %v230
    %v232 = vadd.f32 %v228, %v231
    %s233 = sld [smem:[#allocation8 + $0x281]]
    %v234 = vstv %s233
    %v235 = vmul.f32 %v174, %v234
    %v236 = vadd.f32 %v232, %v235
    %s237 = sld [smem:[#allocation8 + $0x301]]
    %v238 = vstv %s237
    %v239 = vmul.f32 %v175, %v238
    %v240 = vadd.f32 %v236, %v239
    %s241 = sld [smem:[#allocation8 + $0x381]]
    %v242 = vstv %s241
    %v243 = vmul.f32 %v176, %v242
    %v244 = vadd.f32 %v240, %v243
    %s245 = sld [smem:[#allocation8 + $0x2]]
    %v246 = vstv %s245
    %v247 = vmul.f32 %v169, %v246
    %s248 = sld [smem:[#allocation9 + $0x2]]
    %v249 = vstv %s248
    %v250 = vadd.f32 %v247, %v249
    %s251 = sld [smem:[#allocation8 + $0x82]]
    %v252 = vstv %s251
    %v253 = vmul.f32 %v170, %v252
    %v254 = vadd.f32 %v250, %v253
    %s255 = sld [smem:[#allocation8 + $0x102]]
    %v256 = vstv %s255
    %v257 = vmul.f32 %v171, %v256
    %v258 = vadd.f32 %v254, %v257
    %s259 = sld [smem:[#allocation8 + $0x182]]
    %v260 = vstv %s259
    %v261 = vmul.f32 %v172, %v260
    %v262 = vadd.f32 %v258, %v261
    %s263 = sld [smem:[#allocation8 + $0x202]]
    %v264 = vstv %s263
    %v265 = vmul.f32 %v173, %v264
    %v266 = vadd.f32 %v262, %v265
    %s267 = sld [smem:[#allocation8 + $0x282]]
    %v268 = vstv %s267
    %v269 = vmul.f32 %v174, %v268
    %v270 = vadd.f32 %v266, %v269
    %s271 = sld [smem:[#allocation8 + $0x302]]
    %v272 = vstv %s271
    %v273 = vmul.f32 %v175, %v272
    %v274 = vadd.f32 %v270, %v273
    %s275 = sld [smem:[#allocation8 + $0x382]]
    %v276 = vstv %s275
    %v277 = vmul.f32 %v176, %v276
    %v278 = vadd.f32 %v274, %v277
    %s279 = sld [smem:[#allocation8 + $0x3]]
    %v280 = vstv %s279
    %v281 = vmul.f32 %v169, %v280
    %s282 = sld [smem:[#allocation9 + $0x3]]
    %v283 = vstv %s282
    %v284 = vadd.f32 %v281, %v283
    %s285 = sld [smem:[#allocation8 + $0x83]]
    %v286 = vstv %s285
    %v287 = vmul.f32 %v170, %v286
    %v288 = vadd.f32 %v284, %v287
    %s289 = sld [smem:[#allocation8 + $0x103]]
    %v290 = vstv %s289
    %v291 = vmul.f32 %v171, %v290
    %v292 = vadd.f32 %v288, %v291
    %s293 = sld [smem:[#allocation8 + $0x183]]
    %v294 = vstv %s293
    %v295 = vmul.f32 %v172, %v294
    %v296 = vadd.f32 %v292, %v295
    %s297 = sld [smem:[#allocation8 + $0x203]]
    %v298 = vstv %s297
    %v299 = vmul.f32 %v173, %v298
    %v300 = vadd.f32 %v296, %v299
    %s301 = sld [smem:[#allocation8 + $0x283]]
    %v302 = vstv %s301
    %v303 = vmul.f32 %v174, %v302
    %v304 = vadd.f32 %v300, %v303
    %s305 = sld [smem:[#allocation8 + $0x303]]
    %v306 = vstv %s305
    %v307 = vmul.f32 %v175, %v306
    %v308 = vadd.f32 %v304, %v307
    %s309 = sld [smem:[#allocation8 + $0x383]]
    %v310 = vstv %s309
    %v311 = vmul.f32 %v176, %v310
    %v312 = vadd.f32 %v308, %v311
    %v313 = vmax.f32 %v210, 0.0
    %v314 = vmax.f32 %v244, 0.0
    %v315 = vmax.f32 %v278, 0.0
    %v316 = vmax.f32 %v312, 0.0
    %s317 = sld [smem:[#allocation11]]
    %v318 = vstv %s317
    %v319 = vmul.f32 %v313, %v318
    %s320 = sld [smem:[#allocation2]]
    %v321 = vstv %s320
    %v322 = vadd.f32 %v319, %v321
    %s323 = sld [smem:[#allocation11 + $0x80]]
    %v324 = vstv %s323
    %v325 = vmul.f32 %v314, %v324
    %v326 = vadd.f32 %v322, %v325
    %s327 = sld [smem:[#allocation11 + $0x100]]
    %v328 = vstv %s327
    %v329 = vmul.f32 %v315, %v328
    %v330 = vadd.f32 %v326, %v329
    %s331 = sld [smem:[#allocation11 + $0x180]]
    %v332 = vstv %s331
    %v333 = vmul.f32 %v316, %v332
    %v334 = vadd.f32 %v330, %v333
    %v335 = vxor.u32 %v334, 2147483648
    %v336 = vmul.f32 %v335, 1.442695
    %v337 = vpow.pop %v336
    %v338 = vadd.f32 %v337, 1.0
    %v339 = vrcp.pop %v338
    %v340 = vmul.f32 1.0, %v339
    %341 = vst [vmem:[#allocation12] sm:$0x1] %v340
    // Predicated region
    $region50: #{tpu_custom_call.1} parent=1 // pred_check
      _
    $region51: #{tpu_custom_call.1} parent=1 // pred_check_branch
      %343 = sbr.rel (0) target = $region53
    $region52: #{tpu_custom_call.1} parent=1 // pred_region
      %s345 = ssub.s32 16, 16
      %346 = vsyncadd [#allocation4], %s345
      %s348 = sshll.u32 [#allocation12], 4
      %s349 = int_to_ptr.vmem [resolvable:$true] %s348
      %351 = dma.vmem_to_hbm [thread:$0]  %s349, 16, %s7, [#allocation4]
    $region53: #{tpu_custom_call.1} parent=1 // pred_fallthru
      _
    // Predicated region
    $region54: #{tpu_custom_call.1} parent=1 // pred_check
      _
    $region55: #{tpu_custom_call.1} parent=1 // pred_check_branch
      %353 = sbr.rel (0) target = $region57
    $region56: #{tpu_custom_call.1} parent=1 // pred_region
      %354 = dma.done [#allocation4], 16
    $region57: #{tpu_custom_call.1} parent=1 // pred_fallthru
      _
    %355 = vsyncpa [#allocation4], 1
    %356 = vsyncpa [#allocation5], 1
    %357 = vsyncpa [#allocation7], 1
    %358 = vsyncpa [#allocation10], 1

</llo_original>
